<compile_context>
chip_gen: v5e
topology: v5e:2x2
jax: 0.10.0
libtpu: 0.0.40
codegen_flags: <defaults>
</compile_context>

<pallas_src>
import math
import functools

import jax
import jax.numpy as jnp
from jax import lax
from jax.experimental import pallas as pl
from jax.experimental.pallas import tpu as pltpu


# ----------------------------------------------------------------------------
# Helpers
# ----------------------------------------------------------------------------

def _row_tile(m, cap=256):
    """Largest row-tile <= cap that divides m (prefer multiples of 8)."""
    if m <= cap:
        return m
    for t in range(cap, 0, -1):
        if m % t == 0 and t % 8 == 0:
            return t
    for t in range(cap, 0, -1):
        if m % t == 0:
            return t
    return m


def _layernorm_rows(x, alpha, bias, eps):
    # Matches torch LayerNormalization: scalar alpha/bias, unbiased std (N-1),
    #   alpha * (x - mean) / (std + eps) + bias
    d = x.shape[-1]
    mean = jnp.mean(x, axis=-1, keepdims=True)
    diff = x - mean
    var = jnp.sum(diff * diff, axis=-1, keepdims=True) * (1.0 / (d - 1))
    inv = pl.reciprocal(jnp.sqrt(var) + eps, approx=False)   # EUP, not a VALU divide
    return alpha * diff * inv + bias


def _mha_into(out_ref, q, k, v, mask0, h, scale):
    """Masked multi-head attention; all heads per call, results stored into out_ref (Sq, D)."""
    d = q.shape[-1]
    dk = d // h
    for i in range(h):                                          # unrolled at trace time
        lo, hi = i * dk, (i + 1) * dk
        qh = q[:, lo:hi] * scale
        kh = k[:, lo:hi]
        vh = v[:, lo:hi]
        # contract last dims directly (no explicit K transpose / XLU relayout)
        s = lax.dot_general(qh, kh, (((1,), (1,)), ((), ())),
                            preferred_element_type=jnp.float32)  # (Sq, Sk)
        s = jnp.where(mask0, jnp.float32(-1e9), s)
        mx = jnp.max(s, axis=-1, keepdims=True)
        p = jnp.exp(s - mx)
        l = jnp.sum(p, axis=-1, keepdims=True)
        p = p * pl.reciprocal(l, approx=False)                   # EUP reciprocal
        out_ref[:, lo:hi] = jnp.dot(p, vh, preferred_element_type=jnp.float32)


_SMEM_SPEC = pl.BlockSpec(memory_space=pltpu.MemorySpace.SMEM)
_PAR1 = pltpu.CompilerParams(dimension_semantics=("parallel",))


# ----------------------------------------------------------------------------
# Kernels
# ----------------------------------------------------------------------------

def self_attn_block_kernel(x_ref, lnp_ref, wqkv_ref, wo_ref, m_ref, o_ref,
                           attn_ref, *, h, scale, eps):
    # One batch per grid step.  out = x + W_o(MHA(LN(x), mask))
    x = x_ref[...].astype(jnp.float32)                           # (Sq, D)
    xn = _layernorm_rows(x, lnp_ref[0], lnp_ref[1], eps)
    qkv = jnp.dot(xn, wqkv_ref[...], preferred_element_type=jnp.float32)   # (Sq, 3D)
    d = x.shape[-1]
    q, k, v = qkv[:, :d], qkv[:, d:2 * d], qkv[:, 2 * d:3 * d]
    _mha_into(attn_ref, q, k, v, m_ref[...] == 0, h, scale)
    y = jnp.dot(attn_ref[...], wo_ref[...], preferred_element_type=jnp.float32)
    o_ref[...] = (x + y).astype(o_ref.dtype)


def cross_attn_block_kernel(x_ref, enc_ref, lnp_ref, wq_ref, wkv_ref, wo_ref,
                            m_ref, o_ref, attn_ref, *, h, scale, eps):
    # One batch per grid step.  out = x + W_o(MHA(LN(x) @ Wq, enc @ [Wk|Wv], mask))
    x = x_ref[...].astype(jnp.float32)                           # (Sq, D)
    enc = enc_ref[...].astype(jnp.float32)                       # (Sk, D)
    xn = _layernorm_rows(x, lnp_ref[0], lnp_ref[1], eps)
    q = jnp.dot(xn, wq_ref[...], preferred_element_type=jnp.float32)       # (Sq, D)
    kv = jnp.dot(enc, wkv_ref[...], preferred_element_type=jnp.float32)    # (Sk, 2D)
    d = x.shape[-1]
    k, v = kv[:, :d], kv[:, d:2 * d]
    _mha_into(attn_ref, q, k, v, m_ref[...] == 0, h, scale)
    y = jnp.dot(attn_ref[...], wo_ref[...], preferred_element_type=jnp.float32)
    o_ref[...] = (x + y).astype(o_ref.dtype)


def ln_ffn_residual_kernel(x_ref, lnp_ref, w1_ref, b1_ref, w2_ref, b2_ref, o_ref, *, eps):
    # out = x + Linear2(relu(Linear1(LN(x))))   (dropout identity)
    x = x_ref[...].astype(jnp.float32)
    xn = _layernorm_rows(x, lnp_ref[0], lnp_ref[1], eps)
    hdn = jnp.dot(xn, w1_ref[...], preferred_element_type=jnp.float32) + b1_ref[...]
    hdn = jnp.maximum(hdn, 0.0)
    y = jnp.dot(hdn, w2_ref[...], preferred_element_type=jnp.float32) + b2_ref[...]
    o_ref[...] = (x + y).astype(o_ref.dtype)


# ----------------------------------------------------------------------------
# Pallas wrappers
# ----------------------------------------------------------------------------

def pallas_self_attn_block(x, ln_ab, w_qkv, w_o, mask, h, eps=1e-6):
    B, Sq, D = x.shape
    scale = 1.0 / math.sqrt(D // h)
    return pl.pallas_call(
        functools.partial(self_attn_block_kernel, h=h, scale=scale, eps=eps),
        out_shape=jax.ShapeDtypeStruct((B, Sq, D), jnp.float32),
        grid=(B,),
        in_specs=[
            pl.BlockSpec((None, Sq, D), lambda b: (b, 0, 0)),
            _SMEM_SPEC,
            pl.BlockSpec((D, 3 * D), lambda b: (0, 0)),   # weights stay VMEM-resident
            pl.BlockSpec((D, D), lambda b: (0, 0)),
            pl.BlockSpec((None, Sq, Sq), lambda b: (b, 0, 0)),
        ],
        out_specs=pl.BlockSpec((None, Sq, D), lambda b: (b, 0, 0)),
        scratch_shapes=[pltpu.VMEM((Sq, D), jnp.float32)],
        compiler_params=_PAR1,
    )(x, ln_ab, w_qkv, w_o, mask)


def pallas_cross_attn_block(x, enc, ln_ab, w_q, w_kv, w_o, mask, h, eps=1e-6):
    B, Sq, D = x.shape
    Sk = enc.shape[1]
    scale = 1.0 / math.sqrt(D // h)
    return pl.pallas_call(
        functools.partial(cross_attn_block_kernel, h=h, scale=scale, eps=eps),
        out_shape=jax.ShapeDtypeStruct((B, Sq, D), jnp.float32),
        grid=(B,),
        in_specs=[
            pl.BlockSpec((None, Sq, D), lambda b: (b, 0, 0)),
            pl.BlockSpec((None, Sk, D), lambda b: (b, 0, 0)),
            _SMEM_SPEC,
            pl.BlockSpec((D, D), lambda b: (0, 0)),
            pl.BlockSpec((D, 2 * D), lambda b: (0, 0)),
            pl.BlockSpec((D, D), lambda b: (0, 0)),
            pl.BlockSpec((None, Sq, Sk), lambda b: (b, 0, 0)),
        ],
        out_specs=pl.BlockSpec((None, Sq, D), lambda b: (b, 0, 0)),
        scratch_shapes=[pltpu.VMEM((Sq, D), jnp.float32)],
        compiler_params=_PAR1,
    )(x, enc, ln_ab, w_q, w_kv, w_o, mask)


def pallas_ln_ffn_residual(x2d, ln_ab, w1, b1, w2, b2, eps=1e-6):
    M, D = x2d.shape
    d_ff = w1.shape[1]
    tm = _row_tile(M)
    return pl.pallas_call(
        functools.partial(ln_ffn_residual_kernel, eps=eps),
        out_shape=jax.ShapeDtypeStruct((M, D), jnp.float32),
        grid=(M // tm,),
        in_specs=[
            pl.BlockSpec((tm, D), lambda i: (i, 0)),
            _SMEM_SPEC,
            pl.BlockSpec((D, d_ff), lambda i: (0, 0)),
            pl.BlockSpec((1, d_ff), lambda i: (0, 0)),
            pl.BlockSpec((d_ff, D), lambda i: (0, 0)),
            pl.BlockSpec((1, D), lambda i: (0, 0)),
        ],
        out_specs=pl.BlockSpec((tm, D), lambda i: (i, 0)),
        compiler_params=_PAR1,
    )(x2d, ln_ab, w1, b1.reshape(1, d_ff), w2, b2.reshape(1, D))


# ----------------------------------------------------------------------------
# Decoder block
# ----------------------------------------------------------------------------

def prepare_params(p):
    return {
        "sa_wqkv": jnp.concatenate([p["sa_wq"], p["sa_wk"], p["sa_wv"]], axis=1),
        "sa_wo": p["sa_wo"],
        "ca_wq": p["ca_wq"],
        "ca_wkv": jnp.concatenate([p["ca_wk"], p["ca_wv"]], axis=1),
        "ca_wo": p["ca_wo"],
        "ff_w1": p["ff_w1"], "ff_b1": p["ff_b1"],
        "ff_w2": p["ff_w2"], "ff_b2": p["ff_b2"],
        "ln0_ab": jnp.concatenate([p["ln0_a"], p["ln0_b"]]).astype(jnp.float32),
        "ln1_ab": jnp.concatenate([p["ln1_a"], p["ln1_b"]]).astype(jnp.float32),
        "ln2_ab": jnp.concatenate([p["ln2_a"], p["ln2_b"]]).astype(jnp.float32),
    }


def decoder_block(x, encoder_output, src_mask, tgt_mask, params, h):
    fp = prepare_params(params)
    B, Sq, D = x.shape
    Sk = encoder_output.shape[1]

    # Masks: keep (B, Sq, Sk) only — never broadcast over heads (h-fold HBM saving).
    tmask = jnp.broadcast_to(tgt_mask[:, 0], (B, Sq, Sq)).astype(jnp.int32)
    smask = jnp.broadcast_to(src_mask[:, 0], (B, Sq, Sk)).astype(jnp.int32)

    # residual 0: fused LN -> QKV -> self-attention -> W_o -> +x   (one kernel)
    x = pallas_self_attn_block(x, fp["ln0_ab"], fp["sa_wqkv"], fp["sa_wo"], tmask, h)

    # residual 1: fused LN -> Q proj / enc KV proj -> cross-attn -> W_o -> +x   (one kernel)
    x = pallas_cross_attn_block(x, encoder_output, fp["ln1_ab"], fp["ca_wq"],
                                fp["ca_wkv"], fp["ca_wo"], smask, h)

    # residual 2: fused LN + FFN + residual, row-tiled over B*Sq   (one kernel)
    x2 = pallas_ln_ffn_residual(x.reshape(B * Sq, D), fp["ln2_ab"],
                                fp["ff_w1"], fp["ff_b1"], fp["ff_w2"], fp["ff_b2"])
    return x2.reshape(B, Sq, D)


# ----------------------------------------------------------------------------
# Pure-JAX reference (mirrors the PyTorch module exactly)
# ----------------------------------------------------------------------------

def ref_layernorm(x, alpha, bias, eps=1e-6):
    x = x.astype(jnp.float32)
    mean = jnp.mean(x, axis=-1, keepdims=True)
    std = jnp.std(x, axis=-1, keepdims=True, ddof=1)
    return alpha * (x - mean) / (std + eps) + bias


def ref_mha(x_q, x_kv, wq, wk, wv, wo, mask, h):
    B, Sq, D = x_q.shape
    Sk = x_kv.shape[1]
    dk = D // h
    q = (x_q @ wq).reshape(B, Sq, h, dk).transpose(0, 2, 1, 3)
    k = (x_kv @ wk).reshape(B, Sk, h, dk).transpose(0, 2, 1, 3)
    v = (x_kv @ wv).reshape(B, Sk, h, dk).transpose(0, 2, 1, 3)
    s = jnp.einsum("bhqd,bhkd->bhqk", q, k) / math.sqrt(dk)
    s = jnp.where(mask == 0, -1e9, s)
    p = jax.nn.softmax(s, axis=-1)
    o = jnp.einsum("bhqk,bhkd->bhqd", p, v)
    o = o.transpose(0, 2, 1, 3).reshape(B, Sq, D)
    return o @ wo


def ref_decoder_block(x, enc, src_mask, tgt_mask, p, h):
    ln = ref_layernorm(x, p["ln0_a"][0], p["ln0_b"][0])
    x = x + ref_mha(ln, ln, p["sa_wq"], p["sa_wk"], p["sa_wv"], p["sa_wo"], tgt_mask, h)
    ln = ref_layernorm(x, p["ln1_a"][0], p["ln1_b"][0])
    x = x + ref_mha(ln, enc, p["ca_wq"], p["ca_wk"], p["ca_wv"], p["ca_wo"], src_mask, h)
    ln = ref_layernorm(x, p["ln2_a"][0], p["ln2_b"][0])
    hdn = jnp.maximum(ln @ p["ff_w1"] + p["ff_b1"], 0.0)
    x = x + (hdn @ p["ff_w2"] + p["ff_b2"])
    return x


# ----------------------------------------------------------------------------
# Main
# ----------------------------------------------------------------------------

if __name__ == "__main__":
    B, Sq, Sk = 2, 8, 8
    d_model, h, d_ff = 32, 4, 64

    key = jax.random.PRNGKey(0)
    keys = jax.random.split(key, 16)

    def w(k, shape, scale=0.1):
        return (scale * jax.random.normal(k, shape)).astype(jnp.float32)

    params = {
        # self-attention projections (in, out)
        "sa_wq": w(keys[0], (d_model, d_model)),
        "sa_wk": w(keys[1], (d_model, d_model)),
        "sa_wv": w(keys[2], (d_model, d_model)),
        "sa_wo": w(keys[3], (d_model, d_model)),
        # cross-attention projections
        "ca_wq": w(keys[4], (d_model, d_model)),
        "ca_wk": w(keys[5], (d_model, d_model)),
        "ca_wv": w(keys[6], (d_model, d_model)),
        "ca_wo": w(keys[7], (d_model, d_model)),
        # feed-forward
        "ff_w1": w(keys[8], (d_model, d_ff)),
        "ff_b1": w(keys[9], (d_ff,)),
        "ff_w2": w(keys[10], (d_ff, d_model)),
        "ff_b2": w(keys[11], (d_model,)),
        # layer-norm scalar params (shape (1,), init like the torch module)
        "ln0_a": jnp.ones((1,), jnp.float32), "ln0_b": jnp.zeros((1,), jnp.float32),
        "ln1_a": jnp.ones((1,), jnp.float32), "ln1_b": jnp.zeros((1,), jnp.float32),
        "ln2_a": jnp.ones((1,), jnp.float32), "ln2_b": jnp.zeros((1,), jnp.float32),
    }

    x = jax.random.normal(keys[12], (B, Sq, d_model), jnp.float32)
    enc = jax.random.normal(keys[13], (B, Sk, d_model), jnp.float32)

    # causal target mask (B, 1, Sq, Sq); source padding mask (B, 1, 1, Sk)
    tgt_mask = jnp.tril(jnp.ones((Sq, Sq), jnp.int32))[None, None]
    tgt_mask = jnp.broadcast_to(tgt_mask, (B, 1, Sq, Sq))
    src_lens = jnp.array([Sk, Sk - 3])
    src_mask = (jnp.arange(Sk)[None, :] < src_lens[:, None]).astype(jnp.int32)
    src_mask = src_mask[:, None, None, :]                      # (B, 1, 1, Sk)

    out = decoder_block(x, enc, src_mask, tgt_mask, params, h)
    out = jax.block_until_ready(out)

    ref = ref_decoder_block(x, enc, src_mask, tgt_mask, params, h)
    assert out.shape == (B, Sq, d_model)
    assert jnp.allclose(out, ref, atol=1e-4, rtol=1e-4), \
        f"max abs err {jnp.max(jnp.abs(out - ref))}"

    print("KERNEL_OK")
</pallas_src>

<mosaic_0001>
module attributes {stable_mosaic.version = 11 : i64} {
  func.func @self_attn_block_kernel(%arg0: i32, %arg1: memref<1x8x32xf32, #tpu.memory_space<vmem>>, %arg2: memref<2xf32, #tpu.memory_space<smem>>, %arg3: memref<32x96xf32, #tpu.memory_space<vmem>>, %arg4: memref<32x32xf32, #tpu.memory_space<vmem>>, %arg5: memref<1x8x8xi32, #tpu.memory_space<vmem>>, %arg6: memref<1x8x32xf32, #tpu.memory_space<vmem>>, %arg7: memref<8x32xf32, #tpu.memory_space<vmem>>) attributes {dimension_semantics = [#tpu.dimension_semantics<parallel>], iteration_bounds = array<i64: 2>, scalar_prefetch = 0 : i64, scratch_operands = 1 : i64, tpu.core_type = #tpu.core_type<tc>, window_params = [{transform_indices = @transform_0, window_bounds = array<i64: 1, 8, 32>}, {transform_indices = @transform_1, window_bounds = array<i64: 2>}, {pipeline_mode = #tpu.pipeline_mode<synchronous>, transform_indices = @transform_2, window_bounds = array<i64: 32, 96>}, {pipeline_mode = #tpu.pipeline_mode<synchronous>, transform_indices = @transform_3, window_bounds = array<i64: 32, 32>}, {transform_indices = @transform_4, window_bounds = array<i64: 1, 8, 8>}, {transform_indices = @transform_5, window_bounds = array<i64: 1, 8, 32>}]} {
    %c0 = arith.constant 0 : index
    %c0_0 = arith.constant 0 : index
    %c0_1 = arith.constant 0 : index
    %0 = vector.load %arg1[%c0, %c0_0, %c0_1] : memref<1x8x32xf32, #tpu.memory_space<vmem>>, vector<1x8x32xf32>
    %1 = vector.shape_cast %0 : vector<1x8x32xf32> to vector<8x32xf32>
    %c0_2 = arith.constant 0 : index
    %2 = memref.load %arg2[%c0_2] : memref<2xf32, #tpu.memory_space<smem>>
    %c1 = arith.constant 1 : index
    %3 = memref.load %arg2[%c1] : memref<2xf32, #tpu.memory_space<smem>>
    %cst = arith.constant dense<0.000000e+00> : vector<8xf32>
    %4 = vector.multi_reduction <add>, %1, %cst [1] : vector<8x32xf32> to vector<8xf32>
    %5 = vector.shape_cast %4 : vector<8xf32> to vector<8x1xf32>
    %cst_3 = arith.constant 3.200000e+01 : f32
    %6 = vector.broadcast %cst_3 : f32 to vector<8x1xf32>
    %7 = arith.divf %5, %6 : vector<8x1xf32>
    %8 = vector.broadcast %7 : vector<8x1xf32> to vector<8x32xf32>
    %9 = arith.subf %1, %8 : vector<8x32xf32>
    %10 = arith.mulf %9, %9 : vector<8x32xf32>
    %cst_4 = arith.constant dense<0.000000e+00> : vector<8xf32>
    %11 = vector.multi_reduction <add>, %10, %cst_4 [1] : vector<8x32xf32> to vector<8xf32>
    %12 = vector.shape_cast %11 : vector<8xf32> to vector<8x1xf32>
    %cst_5 = arith.constant 0.0322580636 : f32
    %13 = vector.broadcast %cst_5 : f32 to vector<8x1xf32>
    %14 = arith.mulf %12, %13 : vector<8x1xf32>
    %15 = math.sqrt %14 : vector<8x1xf32>
    %cst_6 = arith.constant 9.99999997E-7 : f32
    %16 = vector.broadcast %cst_6 : f32 to vector<8x1xf32>
    %17 = arith.addf %15, %16 : vector<8x1xf32>
    %18 = tpu.reciprocal %17 : vector<8x1xf32> -> vector<8x1xf32>
    %19 = vector.broadcast %2 : f32 to vector<8x32xf32>
    %20 = arith.mulf %19, %9 : vector<8x32xf32>
    %21 = vector.broadcast %18 : vector<8x1xf32> to vector<8x32xf32>
    %22 = arith.mulf %20, %21 : vector<8x32xf32>
    %23 = vector.broadcast %3 : f32 to vector<8x32xf32>
    %24 = arith.addf %22, %23 : vector<8x32xf32>
    %c0_7 = arith.constant 0 : index
    %c0_8 = arith.constant 0 : index
    %25 = vector.load %arg3[%c0_7, %c0_8] : memref<32x96xf32, #tpu.memory_space<vmem>>, vector<32x96xf32>
    %cst_9 = arith.constant dense<0.000000e+00> : vector<8x96xf32>
    %26 = tpu.matmul %24, %25, %cst_9 {dimension_numbers = #tpu.dot_dimension_numbers<[1], [0], [0], [1], [0, 0, 1, 1], [], []>} : vector<8x32xf32>, vector<32x96xf32>, vector<8x96xf32> -> vector<8x96xf32>
    %27 = vector.extract_strided_slice %26 {offsets = [0, 0], sizes = [8, 32], strides = [1, 1]} : vector<8x96xf32> to vector<8x32xf32>
    %28 = vector.extract_strided_slice %26 {offsets = [0, 32], sizes = [8, 32], strides = [1, 1]} : vector<8x96xf32> to vector<8x32xf32>
    %29 = vector.extract_strided_slice %26 {offsets = [0, 64], sizes = [8, 32], strides = [1, 1]} : vector<8x96xf32> to vector<8x32xf32>
    %c0_10 = arith.constant 0 : index
    %c0_11 = arith.constant 0 : index
    %c0_12 = arith.constant 0 : index
    %30 = vector.load %arg5[%c0_10, %c0_11, %c0_12] : memref<1x8x8xi32, #tpu.memory_space<vmem>>, vector<1x8x8xi32>
    %31 = vector.shape_cast %30 : vector<1x8x8xi32> to vector<8x8xi32>
    %c0_i32 = arith.constant 0 : i32
    %32 = vector.broadcast %c0_i32 : i32 to vector<8x8xi32>
    %33 = arith.cmpi eq, %31, %32 : vector<8x8xi32>
    %34 = vector.extract_strided_slice %27 {offsets = [0, 0], sizes = [8, 8], strides = [1, 1]} : vector<8x32xf32> to vector<8x8xf32>
    %cst_13 = arith.constant 0.353553385 : f32
    %35 = vector.broadcast %cst_13 : f32 to vector<8x8xf32>
    %36 = arith.mulf %34, %35 : vector<8x8xf32>
    %37 = vector.extract_strided_slice %28 {offsets = [0, 0], sizes = [8, 8], strides = [1, 1]} : vector<8x32xf32> to vector<8x8xf32>
    %38 = vector.extract_strided_slice %29 {offsets = [0, 0], sizes = [8, 8], strides = [1, 1]} : vector<8x32xf32> to vector<8x8xf32>
    %cst_14 = arith.constant dense<0.000000e+00> : vector<8x8xf32>
    %39 = tpu.matmul %36, %37, %cst_14 {dimension_numbers = #tpu.dot_dimension_numbers<[1], [1], [0], [0], [0, 0, 1, 0], [], []>} : vector<8x8xf32>, vector<8x8xf32>, vector<8x8xf32> -> vector<8x8xf32>
    %cst_15 = arith.constant -1.000000e+09 : f32
    %40 = vector.broadcast %cst_15 : f32 to vector<8x8xf32>
    %41 = arith.select %33, %40, %39 : vector<8x8xi1>, vector<8x8xf32>
    %cst_16 = arith.constant dense<0xFF800000> : vector<8xf32>
    %42 = vector.multi_reduction <maximumf>, %41, %cst_16 [1] : vector<8x8xf32> to vector<8xf32>
    %43 = vector.shape_cast %42 : vector<8xf32> to vector<8x1xf32>
    %44 = vector.broadcast %43 : vector<8x1xf32> to vector<8x8xf32>
    %45 = arith.subf %41, %44 : vector<8x8xf32>
    %46 = math.exp %45 : vector<8x8xf32>
    %cst_17 = arith.constant dense<0.000000e+00> : vector<8xf32>
    %47 = vector.multi_reduction <add>, %46, %cst_17 [1] : vector<8x8xf32> to vector<8xf32>
    %48 = vector.shape_cast %47 : vector<8xf32> to vector<8x1xf32>
    %49 = tpu.reciprocal %48 : vector<8x1xf32> -> vector<8x1xf32>
    %50 = vector.broadcast %49 : vector<8x1xf32> to vector<8x8xf32>
    %51 = arith.mulf %46, %50 : vector<8x8xf32>
    %cst_18 = arith.constant dense<0.000000e+00> : vector<8x8xf32>
    %52 = tpu.matmul %51, %38, %cst_18 {dimension_numbers = #tpu.dot_dimension_numbers<[1], [0], [0], [1], [0, 0, 1, 1], [], []>} : vector<8x8xf32>, vector<8x8xf32>, vector<8x8xf32> -> vector<8x8xf32>
    %c0_19 = arith.constant 0 : index
    %c0_20 = arith.constant 0 : index
    %53 = vector.load %arg7[%c0_19, %c0_20] : memref<8x32xf32, #tpu.memory_space<vmem>>, vector<8x8xf32>
    tpu.vector_store %arg7[%c0_19, %c0_20], %52 {strides = array<i32>} : memref<8x32xf32, #tpu.memory_space<vmem>>, vector<8x8xf32>,
    %54 = vector.extract_strided_slice %27 {offsets = [0, 8], sizes = [8, 8], strides = [1, 1]} : vector<8x32xf32> to vector<8x8xf32>
    %cst_21 = arith.constant 0.353553385 : f32
    %55 = vector.broadcast %cst_21 : f32 to vector<8x8xf32>
    %56 = arith.mulf %54, %55 : vector<8x8xf32>
    %57 = vector.extract_strided_slice %28 {offsets = [0, 8], sizes = [8, 8], strides = [1, 1]} : vector<8x32xf32> to vector<8x8xf32>
    %58 = vector.extract_strided_slice %29 {offsets = [0, 8], sizes = [8, 8], strides = [1, 1]} : vector<8x32xf32> to vector<8x8xf32>
    %cst_22 = arith.constant dense<0.000000e+00> : vector<8x8xf32>
    %59 = tpu.matmul %56, %57, %cst_22 {dimension_numbers = #tpu.dot_dimension_numbers<[1], [1], [0], [0], [0, 0, 1, 0], [], []>} : vector<8x8xf32>, vector<8x8xf32>, vector<8x8xf32> -> vector<8x8xf32>
    %cst_23 = arith.constant -1.000000e+09 : f32
    %60 = vector.broadcast %cst_23 : f32 to vector<8x8xf32>
    %61 = arith.select %33, %60, %59 : vector<8x8xi1>, vector<8x8xf32>
    %cst_24 = arith.constant dense<0xFF800000> : vector<8xf32>
    %62 = vector.multi_reduction <maximumf>, %61, %cst_24 [1] : vector<8x8xf32> to vector<8xf32>
    %63 = vector.shape_cast %62 : vector<8xf32> to vector<8x1xf32>
    %64 = vector.broadcast %63 : vector<8x1xf32> to vector<8x8xf32>
    %65 = arith.subf %61, %64 : vector<8x8xf32>
    %66 = math.exp %65 : vector<8x8xf32>
    %cst_25 = arith.constant dense<0.000000e+00> : vector<8xf32>
    %67 = vector.multi_reduction <add>, %66, %cst_25 [1] : vector<8x8xf32> to vector<8xf32>
    %68 = vector.shape_cast %67 : vector<8xf32> to vector<8x1xf32>
    %69 = tpu.reciprocal %68 : vector<8x1xf32> -> vector<8x1xf32>
    %70 = vector.broadcast %69 : vector<8x1xf32> to vector<8x8xf32>
    %71 = arith.mulf %66, %70 : vector<8x8xf32>
    %cst_26 = arith.constant dense<0.000000e+00> : vector<8x8xf32>
    %72 = tpu.matmul %71, %58, %cst_26 {dimension_numbers = #tpu.dot_dimension_numbers<[1], [0], [0], [1], [0, 0, 1, 1], [], []>} : vector<8x8xf32>, vector<8x8xf32>, vector<8x8xf32> -> vector<8x8xf32>
    %c0_27 = arith.constant 0 : index
    %c8 = arith.constant 8 : index
    %73 = vector.load %arg7[%c0_27, %c8] : memref<8x32xf32, #tpu.memory_space<vmem>>, vector<8x8xf32>
    tpu.vector_store %arg7[%c0_27, %c8], %72 {strides = array<i32>} : memref<8x32xf32, #tpu.memory_space<vmem>>, vector<8x8xf32>,
    %74 = vector.extract_strided_slice %27 {offsets = [0, 16], sizes = [8, 8], strides = [1, 1]} : vector<8x32xf32> to vector<8x8xf32>
    %cst_28 = arith.constant 0.353553385 : f32
    %75 = vector.broadcast %cst_28 : f32 to vector<8x8xf32>
    %76 = arith.mulf %74, %75 : vector<8x8xf32>
    %77 = vector.extract_strided_slice %28 {offsets = [0, 16], sizes = [8, 8], strides = [1, 1]} : vector<8x32xf32> to vector<8x8xf32>
    %78 = vector.extract_strided_slice %29 {offsets = [0, 16], sizes = [8, 8], strides = [1, 1]} : vector<8x32xf32> to vector<8x8xf32>
    %cst_29 = arith.constant dense<0.000000e+00> : vector<8x8xf32>
    %79 = tpu.matmul %76, %77, %cst_29 {dimension_numbers = #tpu.dot_dimension_numbers<[1], [1], [0], [0], [0, 0, 1, 0], [], []>} : vector<8x8xf32>, vector<8x8xf32>, vector<8x8xf32> -> vector<8x8xf32>
    %cst_30 = arith.constant -1.000000e+09 : f32
    %80 = vector.broadcast %cst_30 : f32 to vector<8x8xf32>
    %81 = arith.select %33, %80, %79 : vector<8x8xi1>, vector<8x8xf32>
    %cst_31 = arith.constant dense<0xFF800000> : vector<8xf32>
    %82 = vector.multi_reduction <maximumf>, %81, %cst_31 [1] : vector<8x8xf32> to vector<8xf32>
    %83 = vector.shape_cast %82 : vector<8xf32> to vector<8x1xf32>
    %84 = vector.broadcast %83 : vector<8x1xf32> to vector<8x8xf32>
    %85 = arith.subf %81, %84 : vector<8x8xf32>
    %86 = math.exp %85 : vector<8x8xf32>
    %cst_32 = arith.constant dense<0.000000e+00> : vector<8xf32>
    %87 = vector.multi_reduction <add>, %86, %cst_32 [1] : vector<8x8xf32> to vector<8xf32>
    %88 = vector.shape_cast %87 : vector<8xf32> to vector<8x1xf32>
    %89 = tpu.reciprocal %88 : vector<8x1xf32> -> vector<8x1xf32>
    %90 = vector.broadcast %89 : vector<8x1xf32> to vector<8x8xf32>
    %91 = arith.mulf %86, %90 : vector<8x8xf32>
    %cst_33 = arith.constant dense<0.000000e+00> : vector<8x8xf32>
    %92 = tpu.matmul %91, %78, %cst_33 {dimension_numbers = #tpu.dot_dimension_numbers<[1], [0], [0], [1], [0, 0, 1, 1], [], []>} : vector<8x8xf32>, vector<8x8xf32>, vector<8x8xf32> -> vector<8x8xf32>
    %c0_34 = arith.constant 0 : index
    %c16 = arith.constant 16 : index
    %93 = vector.load %arg7[%c0_34, %c16] : memref<8x32xf32, #tpu.memory_space<vmem>>, vector<8x8xf32>
    tpu.vector_store %arg7[%c0_34, %c16], %92 {strides = array<i32>} : memref<8x32xf32, #tpu.memory_space<vmem>>, vector<8x8xf32>,
    %94 = vector.extract_strided_slice %27 {offsets = [0, 24], sizes = [8, 8], strides = [1, 1]} : vector<8x32xf32> to vector<8x8xf32>
    %cst_35 = arith.constant 0.353553385 : f32
    %95 = vector.broadcast %cst_35 : f32 to vector<8x8xf32>
    %96 = arith.mulf %94, %95 : vector<8x8xf32>
    %97 = vector.extract_strided_slice %28 {offsets = [0, 24], sizes = [8, 8], strides = [1, 1]} : vector<8x32xf32> to vector<8x8xf32>
    %98 = vector.extract_strided_slice %29 {offsets = [0, 24], sizes = [8, 8], strides = [1, 1]} : vector<8x32xf32> to vector<8x8xf32>
    %cst_36 = arith.constant dense<0.000000e+00> : vector<8x8xf32>
    %99 = tpu.matmul %96, %97, %cst_36 {dimension_numbers = #tpu.dot_dimension_numbers<[1], [1], [0], [0], [0, 0, 1, 0], [], []>} : vector<8x8xf32>, vector<8x8xf32>, vector<8x8xf32> -> vector<8x8xf32>
    %cst_37 = arith.constant -1.000000e+09 : f32
    %100 = vector.broadcast %cst_37 : f32 to vector<8x8xf32>
    %101 = arith.select %33, %100, %99 : vector<8x8xi1>, vector<8x8xf32>
    %cst_38 = arith.constant dense<0xFF800000> : vector<8xf32>
    %102 = vector.multi_reduction <maximumf>, %101, %cst_38 [1] : vector<8x8xf32> to vector<8xf32>
    %103 = vector.shape_cast %102 : vector<8xf32> to vector<8x1xf32>
    %104 = vector.broadcast %103 : vector<8x1xf32> to vector<8x8xf32>
    %105 = arith.subf %101, %104 : vector<8x8xf32>
    %106 = math.exp %105 : vector<8x8xf32>
    %cst_39 = arith.constant dense<0.000000e+00> : vector<8xf32>
    %107 = vector.multi_reduction <add>, %106, %cst_39 [1] : vector<8x8xf32> to vector<8xf32>
    %108 = vector.shape_cast %107 : vector<8xf32> to vector<8x1xf32>
    %109 = tpu.reciprocal %108 : vector<8x1xf32> -> vector<8x1xf32>
    %110 = vector.broadcast %109 : vector<8x1xf32> to vector<8x8xf32>
    %111 = arith.mulf %106, %110 : vector<8x8xf32>
    %cst_40 = arith.constant dense<0.000000e+00> : vector<8x8xf32>
    %112 = tpu.matmul %111, %98, %cst_40 {dimension_numbers = #tpu.dot_dimension_numbers<[1], [0], [0], [1], [0, 0, 1, 1], [], []>} : vector<8x8xf32>, vector<8x8xf32>, vector<8x8xf32> -> vector<8x8xf32>
    %c0_41 = arith.constant 0 : index
    %c24 = arith.constant 24 : index
    %113 = vector.load %arg7[%c0_41, %c24] : memref<8x32xf32, #tpu.memory_space<vmem>>, vector<8x8xf32>
    tpu.vector_store %arg7[%c0_41, %c24], %112 {strides = array<i32>} : memref<8x32xf32, #tpu.memory_space<vmem>>, vector<8x8xf32>,
    %c0_42 = arith.constant 0 : index
    %c0_43 = arith.constant 0 : index
    %114 = vector.load %arg7[%c0_42, %c0_43] : memref<8x32xf32, #tpu.memory_space<vmem>>, vector<8x32xf32>
    %c0_44 = arith.constant 0 : index
    %c0_45 = arith.constant 0 : index
    %115 = vector.load %arg4[%c0_44, %c0_45] : memref<32x32xf32, #tpu.memory_space<vmem>>, vector<32x32xf32>
    %cst_46 = arith.constant dense<0.000000e+00> : vector<8x32xf32>
    %116 = tpu.matmul %114, %115, %cst_46 {dimension_numbers = #tpu.dot_dimension_numbers<[1], [0], [0], [1], [0, 0, 1, 1], [], []>} : vector<8x32xf32>, vector<32x32xf32>, vector<8x32xf32> -> vector<8x32xf32>
    %117 = arith.addf %1, %116 : vector<8x32xf32>
    %c0_47 = arith.constant 0 : index
    %c0_48 = arith.constant 0 : index
    %c0_49 = arith.constant 0 : index
    %118 = vector.load %arg6[%c0_47, %c0_48, %c0_49] : memref<1x8x32xf32, #tpu.memory_space<vmem>>, vector<1x8x32xf32>
    %119 = vector.shape_cast %118 : vector<1x8x32xf32> to vector<8x32xf32>
    %120 = vector.shape_cast %117 : vector<8x32xf32> to vector<1x8x32xf32>
    tpu.vector_store %arg6[%c0_47, %c0_48, %c0_49], %120 {strides = array<i32>} : memref<1x8x32xf32, #tpu.memory_space<vmem>>, vector<1x8x32xf32>,
    return
  }
  func.func @transform_0(%arg0: i32) -> (i32, i32, i32) {
    %c0_i32 = arith.constant 0 : i32
    %c0_i32_0 = arith.constant 0 : i32
    %c0_i32_1 = arith.constant 0 : i32
    return %arg0, %c0_i32, %c0_i32_0 : i32, i32, i32
  }
  func.func @transform_1(%arg0: i32) -> i32 {
    %c0_i32 = arith.constant 0 : i32
    %c0_i32_0 = arith.constant 0 : i32
    return %c0_i32 : i32
  }
  func.func @transform_2(%arg0: i32) -> (i32, i32) {
    %c0_i32 = arith.constant 0 : i32
    %c0_i32_0 = arith.constant 0 : i32
    %c0_i32_1 = arith.constant 0 : i32
    return %c0_i32, %c0_i32_0 : i32, i32
  }
  func.func @transform_3(%arg0: i32) -> (i32, i32) {
    %c0_i32 = arith.constant 0 : i32
    %c0_i32_0 = arith.constant 0 : i32
    %c0_i32_1 = arith.constant 0 : i32
    return %c0_i32, %c0_i32_0 : i32, i32
  }
  func.func @transform_4(%arg0: i32) -> (i32, i32, i32) {
    %c0_i32 = arith.constant 0 : i32
    %c0_i32_0 = arith.constant 0 : i32
    %c0_i32_1 = arith.constant 0 : i32
    return %arg0, %c0_i32, %c0_i32_0 : i32, i32, i32
  }
  func.func @transform_5(%arg0: i32) -> (i32, i32, i32) {
    %c0_i32 = arith.constant 0 : i32
    %c0_i32_0 = arith.constant 0 : i32
    %c0_i32_1 = arith.constant 0 : i32
    return %arg0, %c0_i32, %c0_i32_0 : i32, i32, i32
  }
}

</mosaic_0001>

<llo_original>
// kernel: tpu_custom_call.1
$region0: #{tpu_custom_call.1}
  #allocation0 [shape = 'u32[]', space=smem, size = 0x4, offset = 0x4, fixed_abs, tag = 'smem constant byte address 0x4 - core index']
  #allocation1 [shape = 'u32[72,128]{1,0:T(1,128)}', space=vmem, size = 0x9000, scoped, tag = 'internal scratch']
  #allocation2 [shape = 'f32[8,32]{1,0:T(8,128)}', space=vmem, size = 0x1000, scoped, tag = 'scratch operand']
  %s0 = inlined_call_operand.hbm [shape: f32[2,8,32], index: 0, kind: input, shape index: {}]
  %s1 = inlined_call_operand.hbm [shape: f32[2], index: 1, kind: input, shape index: {}]
  %s2 = inlined_call_operand.hbm [shape: f32[32,96], index: 2, kind: input, shape index: {}]
  %s3 = inlined_call_operand.hbm [shape: f32[32,32], index: 3, kind: input, shape index: {}]
  %s4 = inlined_call_operand.hbm [shape: s32[2,8,8], index: 4, kind: input, shape index: {}]
  %s5 = inlined_call_operand.hbm [shape: f32[2,8,32], index: 5, kind: output, shape index: {}]
  %s6 = sld [smem:[#allocation0]]
  $region73: #{tpu_custom_call.1} parent=0
    _
  %s8 = ssub.s32 1, %s6
  %s9 = scalar_select 0, %s8, %s6
  $region1: #{tpu_custom_call.1} parent=0
    #allocation3 [shape = 'u8[8192]{0}', space=vmem, size = 0x2000, scoped, tag = 'input window, operand 0']
    #allocation4 [shape = 's32[2]{0}', space=sflag, size = 0x8, scoped, tag = 'scoped memory for tpu_custom_call.1']
    #allocation5 [shape = 's32[2]{0}', space=sflag, size = 0x8, scoped, tag = 'scoped memory for tpu_custom_call.1']
    #allocation6 [shape = 's32[2]{0}', space=sflag, size = 0x8, scoped, tag = 'scoped memory for tpu_custom_call.1']
    #allocation7 [shape = 'u8[512]{0}', space=smem, size = 0x200, scoped, tag = 'input window, operand 1, single buffered']
    #allocation8 [shape = 'u8[16384]{0}', space=vmem, size = 0x4000, scoped, tag = 'input window, operand 2, single buffered']
    #allocation9 [shape = 's32[1]{0}', space=sflag, size = 0x4, scoped, tag = 'scoped memory for tpu_custom_call.1']
    #allocation10 [shape = 'u8[16384]{0}', space=vmem, size = 0x4000, scoped, tag = 'input window, operand 3, single buffered']
    #allocation11 [shape = 'u8[8192]{0}', space=vmem, size = 0x2000, scoped, tag = 'input window, operand 4']
    #allocation12 [shape = 's32[2]{0}', space=sflag, size = 0x8, scoped, tag = 'scoped memory for tpu_custom_call.1']
    #allocation13 [shape = 'u8[8192]{0}', space=vmem, size = 0x2000, scoped, tag = 'output window, operand 0']
    %10 = vsyncpa [#allocation4], 0
    %s11 = scalar_lea.sflag [#allocation4], 1
    %12 = vsyncpa %s11, 0
    %13 = vsyncpa [#allocation6], 0
    %14 = vsyncpa [#allocation9], 0
    %15 = vsyncpa [#allocation12], 0
    %s16 = scalar_lea.sflag [#allocation12], 1
    %17 = vsyncpa %s16, 0
    %18 = vsyncpa [#allocation5], 0
    %s19 = scalar_lea.sflag [#allocation5], 1
    %20 = vsyncpa %s19, 0
    loop: start=0, step=1, limit=4
    $region2: #{tpu_custom_call.1} parent=1 // loop_pre_header
      _
    $region3: #{tpu_custom_call.1} parent=1 // loop_header
      %s22 = sphi 0, %s26
      %p23 = scmp.ge.s32.totalorder %s22, 4
      %s32 = sphi 0, %s34
      %s35 = sphi 0, %s32
      %s36 = sphi 0, %s35
      %s52 = sphi 0, %s36
      %s56 = sphi 0, %s56
      %s58 = sphi 0, %s56
      %s59 = sphi 0, %s58
      %s73 = sphi 0, %s59
      %s77 = sphi 0, %s77
      %s79 = sphi 0, %s77
      %s80 = sphi 0, %s79
      %s94 = sphi 0, %s80
      %s98 = sphi 0, %s98
      %s100 = sphi 0, %s98
      %s101 = sphi 0, %s100
      %s115 = sphi 0, %s101
      %s121 = sphi 0, %s123
      %s124 = sphi 0, %s121
      %s125 = sphi 0, %s124
      %s141 = sphi 0, %s125
      %s147 = sphi 0, %s149
      %s150 = sphi 0, %s147
      %s151 = sphi 0, %s150
      %s167 = sphi 0, %s151
    $region4: #{tpu_custom_call.1} parent=1 // loop_header_branch
      %25 = sbr.rel (%p23) target = $region8
    $region5: #{tpu_custom_call.1} parent=1 // loop_body
      %s27 = ssub.s32 %s22, 1
      %s28 = ssub.s32 %s22, 2
      %s29 = sadd.s32 %s22, 1
      %s30 = ssub.s32 %s22, %s29
      %p31 = scmp.eq.s32.totalorder %s30, 0
      %s33 = sadd.s32 %s32, 1
      %s34 = scalar_select %p31, %s32, %s33
      %p37 = pneg %p31
      %p38 = scmp.eq.s32.totalorder %s22, 1
      %p39 = por %p37, %p38
      %p40 = scmp.ne.s32.totalorder %s32, %s35
      %p41 = scmp.eq.s32.totalorder %s22, 0
      %p42 = por %p40, %p41
      %p43 = scmp.ne.s32.totalorder %s32, %s35
      %p44 = scmp.eq.s32.totalorder %s27, 1
      %p45 = por %p43, %p44
      %p46 = scmp.ne.s32.totalorder %s35, %s36
      %p47 = scmp.eq.s32.totalorder %s27, 0
      %p48 = por %p46, %p47
      %p49 = scmp.ne.s32.totalorder %s35, %s36
      %p50 = scmp.eq.s32.totalorder %s28, 1
      %p51 = por %p49, %p50
      %p53 = scmp.ne.s32.totalorder %s36, %s52
      %p54 = scmp.eq.s32.totalorder %s28, 0
      %p55 = por %p53, %p54
      %s57 = sadd.s32 %s56, 1
      %p60 = scmp.eq.s32.totalorder %s22, 1
      %p61 = scmp.ne.s32.totalorder %s56, %s58
      %p62 = scmp.eq.s32.totalorder %s22, 0
      %p63 = por %p61, %p62
      %p64 = scmp.ne.s32.totalorder %s56, %s58
      %p65 = scmp.eq.s32.totalorder %s27, 1
      %p66 = por %p64, %p65
      %p67 = scmp.ne.s32.totalorder %s58, %s59
      %p68 = scmp.eq.s32.totalorder %s27, 0
      %p69 = por %p67, %p68
      %p70 = scmp.ne.s32.totalorder %s58, %s59
      %p71 = scmp.eq.s32.totalorder %s28, 1
      %p72 = por %p70, %p71
      %p74 = scmp.ne.s32.totalorder %s59, %s73
      %p75 = scmp.eq.s32.totalorder %s28, 0
      %p76 = por %p74, %p75
      %s78 = sadd.s32 %s77, 1
      %p81 = scmp.eq.s32.totalorder %s22, 1
      %p82 = scmp.ne.s32.totalorder %s77, %s79
      %p83 = scmp.eq.s32.totalorder %s22, 0
      %p84 = por %p82, %p83
      %p85 = scmp.ne.s32.totalorder %s77, %s79
      %p86 = scmp.eq.s32.totalorder %s27, 1
      %p87 = por %p85, %p86
      %p88 = scmp.ne.s32.totalorder %s79, %s80
      %p89 = scmp.eq.s32.totalorder %s27, 0
      %p90 = por %p88, %p89
      %p91 = scmp.ne.s32.totalorder %s79, %s80
      %p92 = scmp.eq.s32.totalorder %s28, 1
      %p93 = por %p91, %p92
      %p95 = scmp.ne.s32.totalorder %s80, %s94
      %p96 = scmp.eq.s32.totalorder %s28, 0
      %p97 = por %p95, %p96
      %s99 = sadd.s32 %s98, 1
      %p102 = scmp.eq.s32.totalorder %s22, 1
      %p103 = scmp.ne.s32.totalorder %s98, %s100
      %p104 = scmp.eq.s32.totalorder %s22, 0
      %p105 = por %p103, %p104
      %p106 = scmp.ne.s32.totalorder %s98, %s100
      %p107 = scmp.eq.s32.totalorder %s27, 1
      %p108 = por %p106, %p107
      %p109 = scmp.ne.s32.totalorder %s100, %s101
      %p110 = scmp.eq.s32.totalorder %s27, 0
      %p111 = por %p109, %p110
      %p112 = scmp.ne.s32.totalorder %s100, %s101
      %p113 = scmp.eq.s32.totalorder %s28, 1
      %p114 = por %p112, %p113
      %p116 = scmp.ne.s32.totalorder %s101, %s115
      %p117 = scmp.eq.s32.totalorder %s28, 0
      %p118 = por %p116, %p117
      %s119 = ssub.s32 %s22, %s29
      %p120 = scmp.eq.s32.totalorder %s119, 0
      %s122 = sadd.s32 %s121, 1
      %s123 = scalar_select %p120, %s121, %s122
      %p126 = pneg %p120
      %p127 = scmp.eq.s32.totalorder %s22, 1
      %p128 = por %p126, %p127
      %p129 = scmp.ne.s32.totalorder %s121, %s124
      %p130 = scmp.eq.s32.totalorder %s22, 0
      %p131 = por %p129, %p130
      %p132 = scmp.ne.s32.totalorder %s121, %s124
      %p133 = scmp.eq.s32.totalorder %s27, 1
      %p134 = por %p132, %p133
      %p135 = scmp.ne.s32.totalorder %s124, %s125
      %p136 = scmp.eq.s32.totalorder %s27, 0
      %p137 = por %p135, %p136
      %p138 = scmp.ne.s32.totalorder %s124, %s125
      %p139 = scmp.eq.s32.totalorder %s28, 1
      %p140 = por %p138, %p139
      %p142 = scmp.ne.s32.totalorder %s125, %s141
      %p143 = scmp.eq.s32.totalorder %s28, 0
      %p144 = por %p142, %p143
      %s145 = ssub.s32 %s22, %s29
      %p146 = scmp.eq.s32.totalorder %s145, 0
      %s148 = sadd.s32 %s147, 1
      %s149 = scalar_select %p146, %s147, %s148
      %p152 = pneg %p146
      %p153 = scmp.eq.s32.totalorder %s22, 1
      %p154 = por %p152, %p153
      %p155 = scmp.ne.s32.totalorder %s147, %s150
      %p156 = scmp.eq.s32.totalorder %s22, 0
      %p157 = por %p155, %p156
      %p158 = scmp.ne.s32.totalorder %s147, %s150
      %p159 = scmp.eq.s32.totalorder %s27, 1
      %p160 = por %p158, %p159
      %p161 = scmp.ne.s32.totalorder %s150, %s151
      %p162 = scmp.eq.s32.totalorder %s27, 0
      %p163 = por %p161, %p162
      %p164 = scmp.ne.s32.totalorder %s150, %s151
      %p165 = scmp.eq.s32.totalorder %s28, 1
      %p166 = por %p164, %p165
      %p168 = scmp.ne.s32.totalorder %s151, %s167
      %p169 = scmp.eq.s32.totalorder %s28, 0
      %p170 = por %p168, %p169
      %p171 = scmp.le.s32.totalorder 1, %s22
      %p172 = scmp.lt.s32.totalorder %s22, 3
      %p173 = pnand %p171, %p172
      %p174 = pneg %p173
      // Predicated region
      $region9: #{tpu_custom_call.1} parent=5 // pred_check
        _
      $region10: #{tpu_custom_call.1} parent=5 // pred_check_branch
        %176 = sbr.rel (%p173) target = $region12
      $region11: #{tpu_custom_call.1} parent=5 // pred_region
        %s177 = ssub.s32 %s22, 1
        // Predicated region
        $region13: #{tpu_custom_call.1} parent=11 // pred_check
          %p178 = pneg %p69
        $region14: #{tpu_custom_call.1} parent=11 // pred_check_branch
          %180 = sbr.rel (%p178) target = $region16
        $region15: #{tpu_custom_call.1} parent=11 // pred_region
          %182 = vsyncadd [#allocation6], 0
          %s184 = sshll.u32 %s1, 4
          %s185 = int_to_ptr.hbm [resolvable:$true] %s184
          %187 = dma.hbm_to_smem %s185, 16, [#allocation7], [#allocation6]
        $region16: #{tpu_custom_call.1} parent=11 // pred_fallthru
          _
        // Predicated region
        $region17: #{tpu_custom_call.1} parent=11 // pred_check
          %p188 = pneg %p90
        $region18: #{tpu_custom_call.1} parent=11 // pred_check_branch
          %190 = sbr.rel (%p188) target = $region20
        $region19: #{tpu_custom_call.1} parent=11 // pred_region
          %192 = vsyncadd [#allocation9], 0
          %s193 = sshll.u32 %s2, 4
          %s194 = int_to_ptr.hbm [resolvable:$true] %s193
          %s195 = sshll.u32 [#allocation8], 4
          %s196 = int_to_ptr.vmem [resolvable:$true] %s195
          %201 = dma.hbm_to_vmem [thread:$0]  %s194, 512, %s196, [#allocation9], 128, 128, 8
        $region20: #{tpu_custom_call.1} parent=11 // pred_fallthru
          _
        // Predicated region
        $region21: #{tpu_custom_call.1} parent=11 // pred_check
          %p202 = pneg %p111
        $region22: #{tpu_custom_call.1} parent=11 // pred_check_branch
          %204 = sbr.rel (%p202) target = $region24
        $region23: #{tpu_custom_call.1} parent=11 // pred_region
          %206 = vsyncadd [#allocation9], 0
          %s207 = sshll.u32 %s3, 4
          %s208 = int_to_ptr.hbm [resolvable:$true] %s207
          %s209 = sshll.u32 [#allocation10], 4
          %s210 = int_to_ptr.vmem [resolvable:$true] %s209
          %215 = dma.hbm_to_vmem [thread:$0]  %s208, 512, %s210, [#allocation9], 128, 128, 8
        $region24: #{tpu_custom_call.1} parent=11 // pred_fallthru
          _
      $region12: #{tpu_custom_call.1} parent=5 // pred_fallthru
        _
      %p216 = scmp.lt.s32.totalorder %s22, 2
      // Predicated region
      $region25: #{tpu_custom_call.1} parent=5 // pred_check
        %p217 = pneg %p216
      $region26: #{tpu_custom_call.1} parent=5 // pred_check_branch
        %219 = sbr.rel (%p217) target = $region28
      $region27: #{tpu_custom_call.1} parent=5 // pred_region
        // Predicated region
        $region29: #{tpu_custom_call.1} parent=27 // pred_check
          %p220 = pneg %p42
        $region30: #{tpu_custom_call.1} parent=27 // pred_check_branch
          %222 = sbr.rel (%p220) target = $region32
        $region31: #{tpu_custom_call.1} parent=27 // pred_region
          %s223 = sand.u32 %s32, 1
          %s224 = scalar_lea.sflag [#allocation4], %s223
          %s225 = sand.u32 %s32, 1
          %s226 = smul.addr %s225, 8
          %s227 = scalar_lea.vmem [#allocation3], %s226
          %229 = vsyncadd %s224, 0
          %s230 = smul.addr %s22, 8
          %s231 = scalar_lea.hbm %s0, %s230
          %s233 = sshll.u32 %s231, 4
          %s234 = int_to_ptr.hbm [resolvable:$true] %s233
          %s235 = sshll.u32 %s227, 4
          %s236 = int_to_ptr.vmem [resolvable:$true] %s235
          %238 = dma.hbm_to_vmem [thread:$0]  %s234, 128, %s236, %s224
        $region32: #{tpu_custom_call.1} parent=27 // pred_fallthru
          _
        // Predicated region
        $region33: #{tpu_custom_call.1} parent=27 // pred_check
          %p239 = pneg %p131
        $region34: #{tpu_custom_call.1} parent=27 // pred_check_branch
          %241 = sbr.rel (%p239) target = $region36
        $region35: #{tpu_custom_call.1} parent=27 // pred_region
          %s242 = sand.u32 %s121, 1
          %s243 = scalar_lea.sflag [#allocation12], %s242
          %s244 = sand.u32 %s121, 1
          %s245 = smul.addr %s244, 8
          %s246 = scalar_lea.vmem [#allocation11], %s245
          %248 = vsyncadd %s243, 0
          %s249 = smul.addr %s22, 8
          %s250 = scalar_lea.hbm %s4, %s249
          %s252 = sshll.u32 %s250, 4
          %s253 = int_to_ptr.hbm [resolvable:$true] %s252
          %s254 = sshll.u32 %s246, 4
          %s255 = int_to_ptr.vmem [resolvable:$true] %s254
          %257 = dma.hbm_to_vmem [thread:$0]  %s253, 128, %s255, %s243
        $region36: #{tpu_custom_call.1} parent=27 // pred_fallthru
          _
      $region28: #{tpu_custom_call.1} parent=5 // pred_fallthru
        _
      %p258 = scmp.le.s32.totalorder 1, %s22
      %p259 = scmp.lt.s32.totalorder %s22, 3
      %p260 = pnand %p258, %p259
      %p261 = pneg %p260
      // Predicated region
      $region37: #{tpu_custom_call.1} parent=5 // pred_check
        _
      $region38: #{tpu_custom_call.1} parent=5 // pred_check_branch
        %263 = sbr.rel (%p260) target = $region40
      $region39: #{tpu_custom_call.1} parent=5 // pred_region
        %s264 = ssub.s32 %s22, 1
        %s265 = sand.u32 %s35, 1
        %s266 = scalar_lea.sflag [#allocation4], %s265
        %s267 = sand.u32 %s35, 1
        %s268 = smul.addr %s267, 8
        %s269 = scalar_lea.vmem [#allocation3], %s268
        // Predicated region
        $region41: #{tpu_custom_call.1} parent=39 // pred_check
          %p270 = pneg %p48
        $region42: #{tpu_custom_call.1} parent=39 // pred_check_branch
          %272 = sbr.rel (%p270) target = $region44
        $region43: #{tpu_custom_call.1} parent=39 // pred_region
          %274 = dma.done %s266, 128
        $region44: #{tpu_custom_call.1} parent=39 // pred_fallthru
          _
        // Predicated region
        $region45: #{tpu_custom_call.1} parent=39 // pred_check
          %p275 = pneg %p69
        $region46: #{tpu_custom_call.1} parent=39 // pred_check_branch
          %277 = sbr.rel (%p275) target = $region48
        $region47: #{tpu_custom_call.1} parent=39 // pred_region
          %279 = dma.done [#allocation6], 16
        $region48: #{tpu_custom_call.1} parent=39 // pred_fallthru
          _
        // Predicated region
        $region49: #{tpu_custom_call.1} parent=39 // pred_check
          %p280 = pneg %p90
        $region50: #{tpu_custom_call.1} parent=39 // pred_check_branch
          %282 = sbr.rel (%p280) target = $region52
        $region51: #{tpu_custom_call.1} parent=39 // pred_region
          %284 = dma.done [#allocation9], 512
        $region52: #{tpu_custom_call.1} parent=39 // pred_fallthru
          _
        // Predicated region
        $region53: #{tpu_custom_call.1} parent=39 // pred_check
          %p285 = pneg %p111
        $region54: #{tpu_custom_call.1} parent=39 // pred_check_branch
          %287 = sbr.rel (%p285) target = $region56
        $region55: #{tpu_custom_call.1} parent=39 // pred_region
          %289 = dma.done [#allocation9], 512
        $region56: #{tpu_custom_call.1} parent=39 // pred_fallthru
          _
        %s290 = sand.u32 %s124, 1
        %s291 = scalar_lea.sflag [#allocation12], %s290
        %s292 = sand.u32 %s124, 1
        %s293 = smul.addr %s292, 8
        %s294 = scalar_lea.vmem [#allocation11], %s293
        // Predicated region
        $region57: #{tpu_custom_call.1} parent=39 // pred_check
          %p295 = pneg %p137
        $region58: #{tpu_custom_call.1} parent=39 // pred_check_branch
          %297 = sbr.rel (%p295) target = $region60
        $region59: #{tpu_custom_call.1} parent=39 // pred_region
          %299 = dma.done %s291, 128
        $region60: #{tpu_custom_call.1} parent=39 // pred_fallthru
          _
        %300 = sfence
        %s301 = sand.u32 %s35, 1
        %s302 = scalar_lea.sflag [#allocation4], %s301
        %s303 = sand.u32 %s35, 1
        %s304 = smul.addr %s303, 8
        %s305 = scalar_lea.vmem [#allocation3], %s304
        %p306 = pneg %p48
        %p307 = pneg %p45
        %p308 = pneg %p69
        %p309 = pneg %p66
        %p310 = pneg %p90
        %p311 = pneg %p87
        %p312 = pneg %p111
        %p313 = pneg %p108
        %s314 = sand.u32 %s124, 1
        %s315 = scalar_lea.sflag [#allocation12], %s314
        %s316 = sand.u32 %s124, 1
        %s317 = smul.addr %s316, 8
        %s318 = scalar_lea.vmem [#allocation11], %s317
        %p319 = pneg %p137
        %p320 = pneg %p134
        %p321 = pneg %p163
        %p322 = pneg %p160
        %s323 = sand.u32 %s150, 1
        %s324 = scalar_lea.sflag [#allocation5], %s323
        %s325 = sand.u32 %s150, 1
        %s326 = smul.addr %s325, 8
        %s327 = scalar_lea.vmem [#allocation13], %s326
        %v328 = vld [vmem:[%s269] sm:$0xff]
        %s329 = sld [smem:[#allocation7]]
        %s330 = sld [smem:[#allocation7 + $0x1]]
        %vm331 = vcmask 261120
        %v332 = vsel %vm331, %v328, 0.0
        %333 = vadd.xlane.f32.xlu0 %v332
        %v334 = vpop.xlane.xlu0 %333
        %v335 = vrcp.pop 32.0
        %v336 = vmul.f32 32.0, %v335
        %v337 = vsub.f32 1.0, %v336
        %v338 = vmul.f32 %v335, %v337
        %v339 = vadd.f32 %v335, %v338
        %vm340 = vweird.f32 %v335
        %v341 = vsel %vm340, %v335, %v339
        %v342 = vmul.f32 %v334, %v341
        %v343 = vsub.f32 %v328, %v342
        %v344 = vmul.f32 %v343, %v343
        %v345 = vsel %vm331, %v344, 0.0
        %346 = vadd.xlane.f32.xlu0 %v345
        %v347 = vpop.xlane.xlu0 %346
        %v348 = vmul.f32 %v347, 0.032258064
        %v349 = vrsqrt.pop %v348
        %v350 = vmul.f32 %v349, %v348
        %v351 = vmul.f32 %v350, %v349
        %v352 = vmul.f32 0.5, %v351
        %v353 = vsub.f32 1.5, %v352
        %v354 = vmul.f32 %v349, %v353
        %v355 = vmul.f32 %v348, %v354
        %vm356 = vcmp.eq.f32.partialorder %v348, inf
        %v357 = vsel %vm356, %v348, %v355
        %vm358 = vcmp.eq.f32.partialorder %v348, 0.0
        %v359 = vand.u32 %v348, 2147483648
        %v360 = vsel %vm358, %v359, %v357
        %v361 = vadd.f32 %v360, 1e-06
        %v362 = vrcp.pop %v361
        %v363 = vmul.f32 %v361, %v362
        %v364 = vsub.f32 1.0, %v363
        %v365 = vmul.f32 %v362, %v364
        %v366 = vadd.f32 %v362, %v365
        %vm367 = vweird.f32 %v361
        %vm368 = vweird.f32 %v362
        %vm369 = vmor %vm367, %vm368
        %v370 = vsel %vm369, %v362, %v366
        %v371 = vand.u32 2147483647, %v361
        %vm372 = vcmp.eq.f32.partialorder %v371, 8.507059e+37
        %v373 = vand.u32 %v361, 2147483648
        %v374 = vor.u32 1.1754944e-38, %v373
        %v375 = vsel %vm372, %v374, %v370
        %v376 = vstv %s329
        %v377 = vmul.f32 %v376, %v343
        %v378 = vmul.f32 %v377, %v375
        %v379 = vstv %s330
        %v380 = vadd.f32 %v378, %v379
        %v381 = vld [vmem:[#allocation8] sm:$0xff]
        %v382 = vld [vmem:[#allocation8 + $0x8] sm:$0xff]
        %v383 = vld [vmem:[#allocation8 + $0x10] sm:$0xff]
        %v384 = vld [vmem:[#allocation8 + $0x18] sm:$0xff]
        %v386 = vsel %vm331, %v380, 0
        %388 = vmatpush.msra.mxu0 0.0
        %389 = vmatpush.msra.mxu0 0.0
        %390 = vmatpush.msra.mxu0 0.0
        %391 = vmatpush.msra.mxu0 0.0
        %392 = vmatpush.msra.mxu0 0.0
        %393 = vmatpush.msra.mxu0 0.0
        %394 = vmatpush.msra.mxu0 0.0
        %395 = vmatpush.msra.mxu0 0.0
        %396 = vmatpush.msra.mxu0 0.0
        %397 = vmatpush.msra.mxu0 0.0
        %398 = vmatpush.msra.mxu0 0.0
        %399 = vmatpush.msra.mxu0 0.0
        %400 = vmatpush.msra.mxu0 %v384
        %401 = vmatpush.msra.mxu0 %v383
        %402 = vmatpush.msra.mxu0 %v382
        %403 = vmatpush.msra.mxu0 %v381
        %404 = vmatmul.f32.gmra.mxu0 %v386
        %v405 = vpop.f32.mrf.mxu0
        %v406 = vadd.f32 0.0, %v405
        %407 = vdwg.mxu0
        %v408 = vld [vmem:[%s294] sm:$0xff]
        %vm409 = vcmp.eq.s32.totalorder %v408, 0
        %v410 = vmul.f32 %v406, 0.35355338
        %412 = vrot.lane.b32.xlu0 %v406, 96
        %v413 = vpop.permute.xlu0 %412
        %vm414 = vcmask 64512
        %v416 = vsel %vm414, %v410, 0
        %v418 = vsel %vm414, %v413, 0
        %420 = vmatpush.xpose.msra.mxu0 0.0
        %421 = vmatpush.xpose.msra.mxu0 0.0
        %422 = vmatpush.xpose.msra.mxu0 0.0
        %423 = vmatpush.xpose.msra.mxu0 0.0
        %424 = vmatpush.xpose.msra.mxu0 0.0
        %425 = vmatpush.xpose.msra.mxu0 0.0
        %426 = vmatpush.xpose.msra.mxu0 0.0
        %427 = vmatpush.xpose.msra.mxu0 0.0
        %428 = vmatpush.xpose.msra.mxu0 0.0
        %429 = vmatpush.xpose.msra.mxu0 0.0
        %430 = vmatpush.xpose.msra.mxu0 0.0
        %431 = vmatpush.xpose.msra.mxu0 0.0
        %432 = vmatpush.xpose.msra.mxu0 0.0
        %433 = vmatpush.xpose.msra.mxu0 0.0
        %434 = vmatpush.xpose.msra.mxu0 0.0
        %435 = vmatpush.xpose.msra.mxu0 %v418
        %436 = vmatmul.f32.gmra.mxu0 %v416
        %v437 = vpop.f32.mrf.mxu0
        %v438 = vadd.f32 0.0, %v437
        %439 = vdwg.mxu0
        %v440 = vsel %vm409, -1e+09, %v438
        %v441 = vsel %vm414, %v440, -inf
        %442 = vmax.xlane.f32.xlu0 %v441
        %v443 = vpop.xlane.xlu0 %442
        %v444 = vsub.f32 %v440, %v443
        %v445 = vmul.f32 %v444, 1.442695
        %v446 = vpow.pop %v445
        %v447 = vsel %vm414, %v446, 0.0
        %448 = vadd.xlane.f32.xlu0 %v447
        %v449 = vpop.xlane.xlu0 %448
        %v450 = vrcp.pop %v449
        %v451 = vmul.f32 %v449, %v450
        %v452 = vsub.f32 1.0, %v451
        %v453 = vmul.f32 %v450, %v452
        %v454 = vadd.f32 %v450, %v453
        %vm455 = vweird.f32 %v449
        %vm456 = vweird.f32 %v450
        %vm457 = vmor %vm455, %vm456
        %v458 = vsel %vm457, %v450, %v454
        %v459 = vand.u32 2147483647, %v449
        %vm460 = vcmp.eq.f32.partialorder %v459, 8.507059e+37
        %v461 = vand.u32 %v449, 2147483648
        %v462 = vor.u32 1.1754944e-38, %v461
        %v463 = vsel %vm460, %v462, %v458
        %v464 = vmul.f32 %v446, %v463
        %465 = vrot.lane.b32.xlu0 %v406, 64
        %v466 = vpop.permute.xlu0 %465
        %v469 = vsel %vm414, %v464, 0
        %471 = vmatpush.msra.mxu0 0.0
        %472 = vmatpush.msra.mxu0 0.0
        %473 = vmatpush.msra.mxu0 0.0
        %474 = vmatpush.msra.mxu0 0.0
        %475 = vmatpush.msra.mxu0 0.0
        %476 = vmatpush.msra.mxu0 0.0
        %477 = vmatpush.msra.mxu0 0.0
        %478 = vmatpush.msra.mxu0 0.0
        %479 = vmatpush.msra.mxu0 0.0
        %480 = vmatpush.msra.mxu0 0.0
        %481 = vmatpush.msra.mxu0 0.0
        %482 = vmatpush.msra.mxu0 0.0
        %483 = vmatpush.msra.mxu0 0.0
        %484 = vmatpush.msra.mxu0 0.0
        %485 = vmatpush.msra.mxu0 0.0
        %486 = vmatpush.msra.mxu0 %v466
        %487 = vmatmul.f32.gmra.mxu0 %v469
        %v488 = vpop.f32.mrf.mxu0
        %v489 = vadd.f32 0.0, %v488
        %490 = vdwg.mxu0
        %491 = vst.msk [vmem:[#allocation2] sm:$0xff] %vm414, %v489
        %492 = vrot.lane.b32.xlu0 %v410, 120
        %v493 = vpop.permute.xlu0 %492
        %494 = vrot.lane.b32.xlu0 %v406, 88
        %v495 = vpop.permute.xlu0 %494
        %v496 = vsel %vm414, %v493, 0
        %v498 = vsel %vm414, %v495, 0
        %500 = vmatpush.xpose.msra.mxu0 0.0
        %501 = vmatpush.xpose.msra.mxu0 0.0
        %502 = vmatpush.xpose.msra.mxu0 0.0
        %503 = vmatpush.xpose.msra.mxu0 0.0
        %504 = vmatpush.xpose.msra.mxu0 0.0
        %505 = vmatpush.xpose.msra.mxu0 0.0
        %506 = vmatpush.xpose.msra.mxu0 0.0
        %507 = vmatpush.xpose.msra.mxu0 0.0
        %508 = vmatpush.xpose.msra.mxu0 0.0
        %509 = vmatpush.xpose.msra.mxu0 0.0
        %510 = vmatpush.xpose.msra.mxu0 0.0
        %511 = vmatpush.xpose.msra.mxu0 0.0
        %512 = vmatpush.xpose.msra.mxu0 0.0
        %513 = vmatpush.xpose.msra.mxu0 0.0
        %514 = vmatpush.xpose.msra.mxu0 0.0
        %515 = vmatpush.xpose.msra.mxu0 %v498
        %516 = vmatmul.f32.gmra.mxu0 %v496
        %v517 = vpop.f32.mrf.mxu0
        %v518 = vadd.f32 0.0, %v517
        %519 = vdwg.mxu0
        %v520 = vsel %vm409, -1e+09, %v518
        %v521 = vsel %vm414, %v520, -inf
        %522 = vmax.xlane.f32.xlu0 %v521
        %v523 = vpop.xlane.xlu0 %522
        %v524 = vsub.f32 %v520, %v523
        %v525 = vmul.f32 %v524, 1.442695
        %v526 = vpow.pop %v525
        %v527 = vsel %vm414, %v526, 0.0
        %528 = vadd.xlane.f32.xlu0 %v527
        %v529 = vpop.xlane.xlu0 %528
        %v530 = vrcp.pop %v529
        %v531 = vmul.f32 %v529, %v530
        %v532 = vsub.f32 1.0, %v531
        %v533 = vmul.f32 %v530, %v532
        %v534 = vadd.f32 %v530, %v533
        %vm535 = vweird.f32 %v529
        %vm536 = vweird.f32 %v530
        %vm537 = vmor %vm535, %vm536
        %v538 = vsel %vm537, %v530, %v534
        %v539 = vand.u32 2147483647, %v529
        %vm540 = vcmp.eq.f32.partialorder %v539, 8.507059e+37
        %v541 = vand.u32 %v529, 2147483648
        %v542 = vor.u32 1.1754944e-38, %v541
        %v543 = vsel %vm540, %v542, %v538
        %v544 = vmul.f32 %v526, %v543
        %545 = vrot.lane.b32.xlu0 %v406, 56
        %v546 = vpop.permute.xlu0 %545
        %v549 = vsel %vm414, %v544, 0
        %551 = vmatpush.msra.mxu0 0.0
        %552 = vmatpush.msra.mxu0 0.0
        %553 = vmatpush.msra.mxu0 0.0
        %554 = vmatpush.msra.mxu0 0.0
        %555 = vmatpush.msra.mxu0 0.0
        %556 = vmatpush.msra.mxu0 0.0
        %557 = vmatpush.msra.mxu0 0.0
        %558 = vmatpush.msra.mxu0 0.0
        %559 = vmatpush.msra.mxu0 0.0
        %560 = vmatpush.msra.mxu0 0.0
        %561 = vmatpush.msra.mxu0 0.0
        %562 = vmatpush.msra.mxu0 0.0
        %563 = vmatpush.msra.mxu0 0.0
        %564 = vmatpush.msra.mxu0 0.0
        %565 = vmatpush.msra.mxu0 0.0
        %566 = vmatpush.msra.mxu0 %v546
        %567 = vmatmul.f32.gmra.mxu0 %v549
        %v568 = vpop.f32.mrf.mxu0
        %v569 = vadd.f32 0.0, %v568
        %570 = vdwg.mxu0
        %572 = vrot.lane.b32.xlu0 %v569, 8
        %v573 = vpop.permute.xlu0 %572
        %vm575 = vcmask 130112
        %576 = vst.msk [vmem:[#allocation2] sm:$0xff] %vm575, %v573
        %577 = vrot.lane.b32.xlu0 %v410, 112
        %v578 = vpop.permute.xlu0 %577
        %579 = vrot.lane.b32.xlu0 %v406, 80
        %v580 = vpop.permute.xlu0 %579
        %v581 = vsel %vm414, %v578, 0
        %v583 = vsel %vm414, %v580, 0
        %585 = vmatpush.xpose.msra.mxu0 0.0
        %586 = vmatpush.xpose.msra.mxu0 0.0
        %587 = vmatpush.xpose.msra.mxu0 0.0
        %588 = vmatpush.xpose.msra.mxu0 0.0
        %589 = vmatpush.xpose.msra.mxu0 0.0
        %590 = vmatpush.xpose.msra.mxu0 0.0
        %591 = vmatpush.xpose.msra.mxu0 0.0
        %592 = vmatpush.xpose.msra.mxu0 0.0
        %593 = vmatpush.xpose.msra.mxu0 0.0
        %594 = vmatpush.xpose.msra.mxu0 0.0
        %595 = vmatpush.xpose.msra.mxu0 0.0
        %596 = vmatpush.xpose.msra.mxu0 0.0
        %597 = vmatpush.xpose.msra.mxu0 0.0
        %598 = vmatpush.xpose.msra.mxu0 0.0
        %599 = vmatpush.xpose.msra.mxu0 0.0
        %600 = vmatpush.xpose.msra.mxu0 %v583
        %601 = vmatmul.f32.gmra.mxu0 %v581
        %v602 = vpop.f32.mrf.mxu0
        %v603 = vadd.f32 0.0, %v602
        %604 = vdwg.mxu0
        %v605 = vsel %vm409, -1e+09, %v603
        %v606 = vsel %vm414, %v605, -inf
        %607 = vmax.xlane.f32.xlu0 %v606
        %v608 = vpop.xlane.xlu0 %607
        %v609 = vsub.f32 %v605, %v608
        %v610 = vmul.f32 %v609, 1.442695
        %v611 = vpow.pop %v610
        %v612 = vsel %vm414, %v611, 0.0
        %613 = vadd.xlane.f32.xlu0 %v612
        %v614 = vpop.xlane.xlu0 %613
        %v615 = vrcp.pop %v614
        %v616 = vmul.f32 %v614, %v615
        %v617 = vsub.f32 1.0, %v616
        %v618 = vmul.f32 %v615, %v617
        %v619 = vadd.f32 %v615, %v618
        %vm620 = vweird.f32 %v614
        %vm621 = vweird.f32 %v615
        %vm622 = vmor %vm620, %vm621
        %v623 = vsel %vm622, %v615, %v619
        %v624 = vand.u32 2147483647, %v614
        %vm625 = vcmp.eq.f32.partialorder %v624, 8.507059e+37
        %v626 = vand.u32 %v614, 2147483648
        %v627 = vor.u32 1.1754944e-38, %v626
        %v628 = vsel %vm625, %v627, %v623
        %v629 = vmul.f32 %v611, %v628
        %630 = vrot.lane.b32.xlu0 %v406, 48
        %v631 = vpop.permute.xlu0 %630
        %v634 = vsel %vm414, %v629, 0
        %636 = vmatpush.msra.mxu0 0.0
        %637 = vmatpush.msra.mxu0 0.0
        %638 = vmatpush.msra.mxu0 0.0
        %639 = vmatpush.msra.mxu0 0.0
        %640 = vmatpush.msra.mxu0 0.0
        %641 = vmatpush.msra.mxu0 0.0
        %642 = vmatpush.msra.mxu0 0.0
        %643 = vmatpush.msra.mxu0 0.0
        %644 = vmatpush.msra.mxu0 0.0
        %645 = vmatpush.msra.mxu0 0.0
        %646 = vmatpush.msra.mxu0 0.0
        %647 = vmatpush.msra.mxu0 0.0
        %648 = vmatpush.msra.mxu0 0.0
        %649 = vmatpush.msra.mxu0 0.0
        %650 = vmatpush.msra.mxu0 0.0
        %651 = vmatpush.msra.mxu0 %v631
        %652 = vmatmul.f32.gmra.mxu0 %v634
        %v653 = vpop.f32.mrf.mxu0
        %v654 = vadd.f32 0.0, %v653
        %655 = vdwg.mxu0
        %657 = vrot.lane.b32.xlu0 %v654, 16
        %v658 = vpop.permute.xlu0 %657
        %vm660 = vcmask 195712
        %661 = vst.msk [vmem:[#allocation2] sm:$0xff] %vm660, %v658
        %662 = vrot.lane.b32.xlu0 %v410, 104
        %v663 = vpop.permute.xlu0 %662
        %664 = vrot.lane.b32.xlu0 %v406, 72
        %v665 = vpop.permute.xlu0 %664
        %v666 = vsel %vm414, %v663, 0
        %v668 = vsel %vm414, %v665, 0
        %670 = vmatpush.xpose.msra.mxu0 0.0
        %671 = vmatpush.xpose.msra.mxu0 0.0
        %672 = vmatpush.xpose.msra.mxu0 0.0
        %673 = vmatpush.xpose.msra.mxu0 0.0
        %674 = vmatpush.xpose.msra.mxu0 0.0
        %675 = vmatpush.xpose.msra.mxu0 0.0
        %676 = vmatpush.xpose.msra.mxu0 0.0
        %677 = vmatpush.xpose.msra.mxu0 0.0
        %678 = vmatpush.xpose.msra.mxu0 0.0
        %679 = vmatpush.xpose.msra.mxu0 0.0
        %680 = vmatpush.xpose.msra.mxu0 0.0
        %681 = vmatpush.xpose.msra.mxu0 0.0
        %682 = vmatpush.xpose.msra.mxu0 0.0
        %683 = vmatpush.xpose.msra.mxu0 0.0
        %684 = vmatpush.xpose.msra.mxu0 0.0
        %685 = vmatpush.xpose.msra.mxu0 %v668
        %686 = vmatmul.f32.gmra.mxu0 %v666
        %v687 = vpop.f32.mrf.mxu0
        %v688 = vadd.f32 0.0, %v687
        %689 = vdwg.mxu0
        %v690 = vsel %vm409, -1e+09, %v688
        %v691 = vsel %vm414, %v690, -inf
        %692 = vmax.xlane.f32.xlu0 %v691
        %v693 = vpop.xlane.xlu0 %692
        %v694 = vsub.f32 %v690, %v693
        %v695 = vmul.f32 %v694, 1.442695
        %v696 = vpow.pop %v695
        %v697 = vsel %vm414, %v696, 0.0
        %698 = vadd.xlane.f32.xlu0 %v697
        %v699 = vpop.xlane.xlu0 %698
        %v700 = vrcp.pop %v699
        %v701 = vmul.f32 %v699, %v700
        %v702 = vsub.f32 1.0, %v701
        %v703 = vmul.f32 %v700, %v702
        %v704 = vadd.f32 %v700, %v703
        %vm705 = vweird.f32 %v699
        %vm706 = vweird.f32 %v700
        %vm707 = vmor %vm705, %vm706
        %v708 = vsel %vm707, %v700, %v704
        %v709 = vand.u32 2147483647, %v699
        %vm710 = vcmp.eq.f32.partialorder %v709, 8.507059e+37
        %v711 = vand.u32 %v699, 2147483648
        %v712 = vor.u32 1.1754944e-38, %v711
        %v713 = vsel %vm710, %v712, %v708
        %v714 = vmul.f32 %v696, %v713
        %715 = vrot.lane.b32.xlu0 %v406, 40
        %v716 = vpop.permute.xlu0 %715
        %v719 = vsel %vm414, %v714, 0
        %721 = vmatpush.msra.mxu0 0.0
        %722 = vmatpush.msra.mxu0 0.0
        %723 = vmatpush.msra.mxu0 0.0
        %724 = vmatpush.msra.mxu0 0.0
        %725 = vmatpush.msra.mxu0 0.0
        %726 = vmatpush.msra.mxu0 0.0
        %727 = vmatpush.msra.mxu0 0.0
        %728 = vmatpush.msra.mxu0 0.0
        %729 = vmatpush.msra.mxu0 0.0
        %730 = vmatpush.msra.mxu0 0.0
        %731 = vmatpush.msra.mxu0 0.0
        %732 = vmatpush.msra.mxu0 0.0
        %733 = vmatpush.msra.mxu0 0.0
        %734 = vmatpush.msra.mxu0 0.0
        %735 = vmatpush.msra.mxu0 0.0
        %736 = vmatpush.msra.mxu0 %v716
        %737 = vmatmul.f32.gmra.mxu0 %v719
        %v738 = vpop.f32.mrf.mxu0
        %v739 = vadd.f32 0.0, %v738
        %740 = vdwg.mxu0
        %742 = vrot.lane.b32.xlu0 %v739, 24
        %v743 = vpop.permute.xlu0 %742
        %vm745 = vcmask 261312
        %746 = vst.msk [vmem:[#allocation2] sm:$0xff] %vm745, %v743
        %v747 = vld [vmem:[#allocation2] sm:$0xff]
        %v748 = vld [vmem:[#allocation10] sm:$0xff]
        %v749 = vld [vmem:[#allocation10 + $0x8] sm:$0xff]
        %v750 = vld [vmem:[#allocation10 + $0x10] sm:$0xff]
        %v751 = vld [vmem:[#allocation10 + $0x18] sm:$0xff]
        %v753 = vsel %vm331, %v747, 0
        %755 = vmatpush.msra.mxu0 0.0
        %756 = vmatpush.msra.mxu0 0.0
        %757 = vmatpush.msra.mxu0 0.0
        %758 = vmatpush.msra.mxu0 0.0
        %759 = vmatpush.msra.mxu0 0.0
        %760 = vmatpush.msra.mxu0 0.0
        %761 = vmatpush.msra.mxu0 0.0
        %762 = vmatpush.msra.mxu0 0.0
        %763 = vmatpush.msra.mxu0 0.0
        %764 = vmatpush.msra.mxu0 0.0
        %765 = vmatpush.msra.mxu0 0.0
        %766 = vmatpush.msra.mxu0 0.0
        %767 = vmatpush.msra.mxu0 %v751
        %768 = vmatpush.msra.mxu0 %v750
        %769 = vmatpush.msra.mxu0 %v749
        %770 = vmatpush.msra.mxu0 %v748
        %771 = vmatmul.f32.gmra.mxu0 %v753
        %v772 = vpop.f32.mrf.mxu0
        %v773 = vadd.f32 0.0, %v772
        %774 = vdwg.mxu0
        %v775 = vadd.f32 %v328, %v773
        %776 = vst.msk [vmem:[%s327] sm:$0xff] %vm331, %v775
        %s777 = sand.u32 %s150, 1
        %s778 = scalar_lea.sflag [#allocation5], %s777
        %s779 = sand.u32 %s150, 1
        %s780 = smul.addr %s779, 8
        %s781 = scalar_lea.vmem [#allocation13], %s780
        // Predicated region
        $region61: #{tpu_custom_call.1} parent=39 // pred_check
          %p782 = pneg %p160
        $region62: #{tpu_custom_call.1} parent=39 // pred_check_branch
          %784 = sbr.rel (%p782) target = $region64
        $region63: #{tpu_custom_call.1} parent=39 // pred_region
          %786 = vsyncadd %s778, 0
          %s787 = smul.addr %s27, 8
          %s788 = scalar_lea.hbm %s5, %s787
          %s790 = sshll.u32 %s781, 4
          %s791 = int_to_ptr.vmem [resolvable:$true] %s790
          %s792 = sshll.u32 %s788, 4
          %s793 = int_to_ptr.hbm [resolvable:$true] %s792
          %795 = dma.vmem_to_hbm [thread:$0]  %s791, 128, %s793, %s778
        $region64: #{tpu_custom_call.1} parent=39 // pred_fallthru
          _
      $region40: #{tpu_custom_call.1} parent=5 // pred_fallthru
        _
      %p796 = scmp.le.s32.totalorder 2, %s22
      // Predicated region
      $region65: #{tpu_custom_call.1} parent=5 // pred_check
        %p797 = pneg %p796
      $region66: #{tpu_custom_call.1} parent=5 // pred_check_branch
        %799 = sbr.rel (%p797) target = $region68
      $region67: #{tpu_custom_call.1} parent=5 // pred_region
        %s800 = ssub.s32 %s22, 2
        // Predicated region
        $region69: #{tpu_custom_call.1} parent=67 // pred_check
          %p801 = pneg %p166
        $region70: #{tpu_custom_call.1} parent=67 // pred_check_branch
          %803 = sbr.rel (%p801) target = $region72
        $region71: #{tpu_custom_call.1} parent=67 // pred_region
          %s804 = sand.u32 %s151, 1
          %s805 = scalar_lea.sflag [#allocation5], %s804
          %s806 = sand.u32 %s151, 1
          %s807 = smul.addr %s806, 8
          %s808 = scalar_lea.vmem [#allocation13], %s807
          %810 = dma.done %s805, 128
        $region72: #{tpu_custom_call.1} parent=67 // pred_fallthru
          _
      $region68: #{tpu_custom_call.1} parent=5 // pred_fallthru
        _
    $region6: #{tpu_custom_call.1} parent=1 // loop_footer
      %s26 = sadd.s32 1, %s22
    $region7: #{tpu_custom_call.1} parent=1 // loop_footer_branch
      %21 = sbr.rel target = $region3
    $region8: #{tpu_custom_call.1} parent=1 // loop_exit
      _
    %811 = vsyncpa [#allocation4], 1
    %s812 = scalar_lea.sflag [#allocation4], 1
    %813 = vsyncpa %s812, 1
    %814 = vsyncpa [#allocation9], 1
    %815 = vsyncpa [#allocation12], 1
    %s816 = scalar_lea.sflag [#allocation12], 1
    %817 = vsyncpa %s816, 1
    %818 = vsyncpa [#allocation5], 1
    %s819 = scalar_lea.sflag [#allocation5], 1
    %820 = vsyncpa %s819, 1
    %821 = vsyncpa [#allocation6], 1
    %s822 = scalar_lea.sflag [#allocation6], 1
    %823 = vsyncpa %s822, 1

</llo_original>
